<compile_context>
chip_gen: v7x
topology: tpu7x:2x2x1
jax: 0.10.0
libtpu: 0.0.40
codegen_flags: <defaults>
</compile_context>

<pallas_src>
import functools
import math

import numpy as np
import jax
import jax.numpy as jnp
from jax.experimental import pallas as pl
from jax.experimental.pallas import tpu as pltpu


# --------------------------------------------------------------------------- #
# Helpers
# --------------------------------------------------------------------------- #
def _round_up(n: int, m: int) -> int:
    return ((n + m - 1) // m) * m


def _sublane(*dtypes) -> int:
    # Minimum second-minor block dim: 8 rows for 4-byte, 16 for 2-byte, 32 for 1-byte.
    return max(max(8, 32 // np.dtype(d).itemsize) for d in dtypes)


def _pick_tm(M: int, D: int, dtypes, *, tm_max: int = 2048,
             vmem_budget: int = 32 * 1024 * 1024) -> int:
    """Largest row tile (multiple of the sublane requirement) that fits the VMEM budget.

    Budget counts every streamed array double-buffered (Pallas auto-pipelining)."""
    sub = _sublane(*dtypes)
    per_row = 2 * D * sum(np.dtype(d).itemsize for d in dtypes)   # 2 bufs per array
    tm_fit = max(sub, (vmem_budget // max(per_row, 1)) // sub * sub)
    tm = min(tm_max, tm_fit, _round_up(M, sub))
    return max(sub, tm)


_COMPILER_PARAMS = pltpu.CompilerParams(
    dimension_semantics=("parallel",),
    vmem_limit_bytes=48 * 1024 * 1024,
)


# --------------------------------------------------------------------------- #
# Kernels
# --------------------------------------------------------------------------- #
def _layernorm_kernel(x_ref, ab_ref, o_ref, *, eps):
    # x_ref: (tm, D) VMEM tile.  ab_ref: (2,) f32 in SMEM = [alpha, bias].
    x = x_ref[...].astype(jnp.float32)
    d = x.shape[-1]
    mean = jnp.sum(x, axis=-1, keepdims=True) * (1.0 / d)
    diff = x - mean
    # torch.Tensor.std() is the unbiased estimator (divide by N-1).
    var = jnp.sum(diff * diff, axis=-1, keepdims=True) * (1.0 / (d - 1))
    std = jnp.sqrt(var)
    # One divide per ROW (shape (tm,1)); the per-element path is a single mul + add.
    scale = ab_ref[0] / (std + eps)
    o_ref[...] = (diff * scale + ab_ref[1]).astype(o_ref.dtype)


def _residual_add_kernel(x_ref, s_ref, o_ref):
    # Eval-mode dropout == identity, so the residual connection is a plain add.
    o_ref[...] = (x_ref[...].astype(jnp.float32)
                  + s_ref[...].astype(jnp.float32)).astype(o_ref.dtype)


def _residual_dropout_kernel(x_ref, s_ref, bits_ref, o_ref, *, threshold, inv_keep):
    # Train-mode dropout: keep each element with prob (1-rate), scale kept by 1/(1-rate).
    # Keep/drop decided in the integer domain: P(bits >= rate*2^32) == 1 - rate.
    s = s_ref[...].astype(jnp.float32)
    keep = bits_ref[...] >= jnp.uint32(threshold)
    kept = jnp.where(keep, s * inv_keep, 0.0)
    o_ref[...] = (x_ref[...].astype(jnp.float32) + kept).astype(o_ref.dtype)


# --------------------------------------------------------------------------- #
# Wrappers
# --------------------------------------------------------------------------- #
def layer_norm(x, alpha, bias, *, eps=1e-6, tm=2048, out_dtype=None):
    """Custom LayerNormalization: alpha*(x-mean)/(std+eps)+bias (unbiased std)."""
    D = x.shape[-1]
    out_dtype = x.dtype if out_dtype is None else out_dtype
    x2d = x.reshape(-1, D)
    M = x2d.shape[0]
    tm_eff = _pick_tm(M, D, (x.dtype, out_dtype), tm_max=tm)
    grid = (pl.cdiv(M, tm_eff),)          # ragged last block: Pallas masks the writes
    ab = jnp.asarray([alpha, bias], dtype=jnp.float32)
    row_spec = pl.BlockSpec((tm_eff, D), lambda i: (i, 0))
    bytes_accessed = M * D * (np.dtype(x.dtype).itemsize + np.dtype(out_dtype).itemsize)

    out2d = pl.pallas_call(
        functools.partial(_layernorm_kernel, eps=float(eps)),
        out_shape=jax.ShapeDtypeStruct((M, D), out_dtype),
        grid_spec=pltpu.PrefetchScalarGridSpec(
            num_scalar_prefetch=0,
            grid=grid,
            in_specs=[
                row_spec,
                pl.BlockSpec(memory_space=pltpu.MemorySpace.SMEM),   # [alpha, bias]
            ],
            out_specs=row_spec,
        ),
        compiler_params=_COMPILER_PARAMS,
        cost_estimate=pl.CostEstimate(
            flops=8 * M * D, transcendentals=M, bytes_accessed=bytes_accessed + 8),
    )(x2d, ab)
    return out2d.reshape(x.shape)


def residual_add(x, s, *, dropout_rate=0.0, training=False, rng_key=None, tm=2048):
    """out = x + dropout(s).  Eval mode: identity dropout; train mode: masked add."""
    D = x.shape[-1]
    x2d = x.reshape(-1, D)
    s2d = s.reshape(-1, D)                 # native dtype; cast in-kernel (VPU slack)
    M = x2d.shape[0]
    out_dtype = x.dtype

    use_dropout = bool(training) and dropout_rate > 0.0
    if use_dropout and dropout_rate >= 1.0:
        return x                           # everything dropped -> pure residual

    dtypes = [x.dtype, s.dtype, out_dtype] + ([jnp.uint32] if use_dropout else [])
    tm_eff = _pick_tm(M, D, tuple(dtypes), tm_max=tm)
    grid = (pl.cdiv(M, tm_eff),)
    row_spec = pl.BlockSpec((tm_eff, D), lambda i: (i, 0))
    cost = pl.CostEstimate(
        flops=3 * M * D, transcendentals=0,
        bytes_accessed=M * D * sum(np.dtype(d).itemsize for d in dtypes))

    if use_dropout:
        if rng_key is None:
            rng_key = jax.random.PRNGKey(0)
        # TODO(synk): on real TPU HW, pltpu.prng_random_bits in-kernel would avoid this
        # extra (M, D) uint32 HBM read; host-side bits keep the kernel portable
        # (interpret mode has no lowering for the TPU hardware PRNG primitives).
        bits = jax.random.bits(rng_key, (M, D), dtype=jnp.uint32)
        threshold = min(int(round(float(dropout_rate) * 2.0 ** 32)), 2 ** 32 - 1)
        out2d = pl.pallas_call(
            functools.partial(_residual_dropout_kernel,
                              threshold=threshold,
                              inv_keep=1.0 / (1.0 - float(dropout_rate))),
            out_shape=jax.ShapeDtypeStruct((M, D), out_dtype),
            grid_spec=pltpu.PrefetchScalarGridSpec(
                num_scalar_prefetch=0, grid=grid,
                in_specs=[row_spec, row_spec, row_spec],
                out_specs=row_spec),
            compiler_params=_COMPILER_PARAMS,
            cost_estimate=cost,
        )(x2d, s2d, bits)
    else:
        out2d = pl.pallas_call(
            _residual_add_kernel,
            out_shape=jax.ShapeDtypeStruct((M, D), out_dtype),
            grid_spec=pltpu.PrefetchScalarGridSpec(
                num_scalar_prefetch=0, grid=grid,
                in_specs=[row_spec, row_spec],
                out_specs=row_spec),
            compiler_params=_COMPILER_PARAMS,
            cost_estimate=cost,
        )(x2d, s2d)
    return out2d.reshape(x.shape)


def residual_connection(x, sublayer, *, alpha=1.0, bias=0.0, eps=1e-6,
                        dropout_rate=0.1, training=False, rng_key=None,
                        tm=2048, norm_dtype=None):
    """Pallas ResidualConnection.forward: x + dropout(sublayer(norm(x)))."""
    nx = layer_norm(x, alpha, bias, eps=eps, tm=tm, out_dtype=norm_dtype)
    # TODO(synk): arbitrary user callable runs as plain JAX here; a known linear sublayer
    # could be fused (norm -> matmul -> dropout -> add) into a single MXU Pallas kernel.
    s = sublayer(nx)
    return residual_add(x, s, dropout_rate=dropout_rate, training=training,
                        rng_key=rng_key, tm=tm)


# --------------------------------------------------------------------------- #
# Demo / correctness check
# --------------------------------------------------------------------------- #
if __name__ == "__main__":
    batch, seq, d_model = 2, 8, 128        # lane-dense feature dim (multiple of 128)
    key = jax.random.PRNGKey(0)
    kx, kw, kb, kd = jax.random.split(key, 4)

    x = jax.random.normal(kx, (batch, seq, d_model), jnp.float32)

    # Representative sublayer: a small linear projection (pure JAX).
    w_sub = jax.random.normal(kw, (d_model, d_model), jnp.float32) / math.sqrt(d_model)
    b_sub = jax.random.normal(kb, (d_model,), jnp.float32) * 0.02
    sublayer = lambda t: jnp.dot(t, w_sub, precision=jax.lax.Precision.HIGHEST) + b_sub

    alpha, bias, eps, p = 1.5, -0.25, 1e-6, 0.1

    # ---- eval mode (dropout == identity), exact check vs torch semantics ----
    out = residual_connection(x, sublayer, alpha=alpha, bias=bias, eps=eps,
                              dropout_rate=p, training=False)
    out = jax.block_until_ready(out)

    mean = x.mean(axis=-1, keepdims=True)
    std = jnp.std(x, axis=-1, keepdims=True, ddof=1)       # torch std() is unbiased
    nx_ref = alpha * (x - mean) / (std + eps) + bias
    s_ref = sublayer(nx_ref)
    ref = x + s_ref

    assert out.shape == x.shape
    assert jnp.allclose(out, ref, atol=1e-4, rtol=1e-4), \
        float(jnp.max(jnp.abs(out - ref)))

    # ---- train mode: every element is either x (dropped) or x + s/(1-p) (kept) ----
    out_tr = residual_connection(x, sublayer, alpha=alpha, bias=bias, eps=eps,
                                 dropout_rate=p, training=True, rng_key=kd)
    out_tr = jax.block_until_ready(out_tr)
    kept = jnp.isclose(out_tr, x + s_ref / (1.0 - p), atol=1e-4, rtol=1e-4)
    dropped = jnp.isclose(out_tr, x, atol=1e-4, rtol=1e-4)
    assert bool(jnp.all(kept | dropped))
    # roughly the right keep fraction (loose bound, small sample)
    frac_kept = float(jnp.mean(kept.astype(jnp.float32)))
    assert 0.7 <= frac_kept <= 1.0, frac_kept

    print("KERNEL_OK")
</pallas_src>

<mosaic_0001>
module attributes {stable_mosaic.version = 11 : i64} {
  func.func @_layernorm_kernel(%arg0: i32, %arg1: memref<16x128xf32, #tpu.memory_space<vmem>>, %arg2: memref<2xf32, #tpu.memory_space<smem>>, %arg3: memref<16x128xf32, #tpu.memory_space<vmem>>) attributes {dimension_semantics = [#tpu.dimension_semantics<parallel>], iteration_bounds = array<i64: 1>, scalar_prefetch = 0 : i64, scratch_operands = 0 : i64, tpu.core_type = #tpu.core_type<tc>, window_params = [{transform_indices = @transform_0, window_bounds = array<i64: 16, 128>}, {transform_indices = @transform_1, window_bounds = array<i64: 2>}, {transform_indices = @transform_2, window_bounds = array<i64: 16, 128>}]} {
    %c0 = arith.constant 0 : index
    %c0_0 = arith.constant 0 : index
    %0 = vector.load %arg1[%c0, %c0_0] : memref<16x128xf32, #tpu.memory_space<vmem>>, vector<16x128xf32>
    %cst = arith.constant dense<0.000000e+00> : vector<16xf32>
    %1 = vector.multi_reduction <add>, %0, %cst [1] : vector<16x128xf32> to vector<16xf32>
    %2 = vector.shape_cast %1 : vector<16xf32> to vector<16x1xf32>
    %cst_1 = arith.constant 7.812500e-03 : f32
    %3 = vector.broadcast %cst_1 : f32 to vector<16x1xf32>
    %4 = arith.mulf %2, %3 : vector<16x1xf32>
    %5 = vector.broadcast %4 : vector<16x1xf32> to vector<16x128xf32>
    %6 = arith.subf %0, %5 : vector<16x128xf32>
    %7 = arith.mulf %6, %6 : vector<16x128xf32>
    %cst_2 = arith.constant dense<0.000000e+00> : vector<16xf32>
    %8 = vector.multi_reduction <add>, %7, %cst_2 [1] : vector<16x128xf32> to vector<16xf32>
    %9 = vector.shape_cast %8 : vector<16xf32> to vector<16x1xf32>
    %cst_3 = arith.constant 0.00787401571 : f32
    %10 = vector.broadcast %cst_3 : f32 to vector<16x1xf32>
    %11 = arith.mulf %9, %10 : vector<16x1xf32>
    %12 = math.sqrt %11 : vector<16x1xf32>
    %c0_4 = arith.constant 0 : index
    %13 = memref.load %arg2[%c0_4] : memref<2xf32, #tpu.memory_space<smem>>
    %cst_5 = arith.constant 9.99999997E-7 : f32
    %14 = vector.broadcast %cst_5 : f32 to vector<16x1xf32>
    %15 = arith.addf %12, %14 : vector<16x1xf32>
    %16 = vector.broadcast %13 : f32 to vector<16x1xf32>
    %17 = arith.divf %16, %15 : vector<16x1xf32>
    %18 = vector.broadcast %17 : vector<16x1xf32> to vector<16x128xf32>
    %19 = arith.mulf %6, %18 : vector<16x128xf32>
    %c1 = arith.constant 1 : index
    %20 = memref.load %arg2[%c1] : memref<2xf32, #tpu.memory_space<smem>>
    %21 = vector.broadcast %20 : f32 to vector<16x128xf32>
    %22 = arith.addf %19, %21 : vector<16x128xf32>
    %c0_6 = arith.constant 0 : index
    %c0_7 = arith.constant 0 : index
    %23 = vector.load %arg3[%c0_6, %c0_7] : memref<16x128xf32, #tpu.memory_space<vmem>>, vector<16x128xf32>
    tpu.vector_store %arg3[%c0_6, %c0_7], %22 {strides = array<i32>} : memref<16x128xf32, #tpu.memory_space<vmem>>, vector<16x128xf32>,
    return
  }
  func.func @transform_0(%arg0: i32) -> (i32, i32) {
    %c0_i32 = arith.constant 0 : i32
    %c0_i32_0 = arith.constant 0 : i32
    return %arg0, %c0_i32 : i32, i32
  }
  func.func @transform_1(%arg0: i32) -> i32 {
    %c0_i32 = arith.constant 0 : i32
    %c0_i32_0 = arith.constant 0 : i32
    return %c0_i32 : i32
  }
  func.func @transform_2(%arg0: i32) -> (i32, i32) {
    %c0_i32 = arith.constant 0 : i32
    %c0_i32_0 = arith.constant 0 : i32
    return %arg0, %c0_i32 : i32, i32
  }
}

</mosaic_0001>

<llo_original>
// kernel: tpu_custom_call.1
$region0: #{tpu_custom_call.1}
  #allocation0 [shape = 'u32[]', space=smem, size = 0x4, offset = 0x4, fixed_abs, tag = 'smem constant byte address 0x4 - core index']
  #allocation1 [shape = 'u32[144,128]{1,0:T(1,128)}', space=vmem, size = 0x12000, scoped, tag = 'internal scratch']
  %s0 = inlined_call_operand.hbm [shape: f32[16,128], index: 0, kind: input, shape index: {}]
  %s1 = inlined_call_operand.vmem [shape: f32[2], index: 1, kind: input, shape index: {}]
  %s2 = inlined_call_operand.hbm [shape: f32[16,128], index: 2, kind: output, shape index: {}]
  %s3 = sld [smem:[#allocation0]]
  $region26: #{tpu_custom_call.1} parent=0
    _
  %s5 = ssub.s32 1, %s3
  %s6 = scalar_select 0, %s5, %s3
  $region1: #{tpu_custom_call.1} parent=0
    #allocation2 [shape = 'u8[8192]{0}', space=vmem, size = 0x2000, scoped, tag = 'input window, operand 0, single buffered']
    #allocation3 [shape = 's32[1]{0}', space=sflag, size = 0x4, scoped, tag = 'scoped memory for tpu_custom_call.1']
    #allocation4 [shape = 's32[1]{0}', space=sflag, size = 0x4, scoped, tag = 'scoped memory for tpu_custom_call.1']
    #allocation5 [shape = 's32[1]{0}', space=sflag, size = 0x4, scoped, tag = 'scoped memory for tpu_custom_call.1']
    #allocation6 [shape = 'u8[512]{0}', space=smem, size = 0x200, scoped, tag = 'input window, operand 1, single buffered']
    #allocation7 [shape = 'u8[8192]{0}', space=vmem, size = 0x2000, scoped, tag = 'output window, operand 0, single buffered']
    %7 = vsyncpa [#allocation3], 0
    %8 = vsyncpa [#allocation5], 0
    %9 = vsyncpa [#allocation4], 0
    // Predicated region
    $region2: #{tpu_custom_call.1} parent=1 // pred_check
      _
    $region3: #{tpu_custom_call.1} parent=1 // pred_check_branch
      %11 = sbr.rel (0) target = $region5
    $region4: #{tpu_custom_call.1} parent=1 // pred_region
      %s13 = ssub.s32 256, 256
      %14 = vsyncadd [#allocation3], %s13
      %s15 = sshll.u32 [#allocation2], 4
      %s16 = int_to_ptr.vmem [resolvable:$true] %s15
      %21 = dma.hbm_to_vmem [thread:$0]  %s0, 256, %s16, [#allocation3], 128, 128, 8
    $region5: #{tpu_custom_call.1} parent=1 // pred_fallthru
      _
    // Predicated region
    $region6: #{tpu_custom_call.1} parent=1 // pred_check
      _
    $region7: #{tpu_custom_call.1} parent=1 // pred_check_branch
      %23 = sbr.rel (0) target = $region9
    $region8: #{tpu_custom_call.1} parent=1 // pred_region
      %s25 = ssub.s32 16, 16
      %26 = vsyncadd [#allocation5], %s25
      %s28 = sshll.u32 %s1, 4
      %s29 = int_to_ptr.vmem [resolvable:$true] %s28
      %31 = dma.vmem_to_smem %s29, 16, [#allocation6], [#allocation5]
    $region9: #{tpu_custom_call.1} parent=1 // pred_fallthru
      _
    // Predicated region
    $region10: #{tpu_custom_call.1} parent=1 // pred_check
      _
    $region11: #{tpu_custom_call.1} parent=1 // pred_check_branch
      %33 = sbr.rel (0) target = $region13
    $region12: #{tpu_custom_call.1} parent=1 // pred_region
      %34 = dma.done [#allocation3], 256
    $region13: #{tpu_custom_call.1} parent=1 // pred_fallthru
      _
    // Predicated region
    $region14: #{tpu_custom_call.1} parent=1 // pred_check
      _
    $region15: #{tpu_custom_call.1} parent=1 // pred_check_branch
      %36 = sbr.rel (0) target = $region17
    $region16: #{tpu_custom_call.1} parent=1 // pred_region
      %37 = dma.done [#allocation5], 16
    $region17: #{tpu_custom_call.1} parent=1 // pred_fallthru
      _
    %38 = sfence
    %v39 = vld [vmem:[#allocation2] sm:$0xff]
    %v40 = vld [vmem:[#allocation2 + $0x8] sm:$0xff]
    %41 = vadd.xlane.f32.xlu0 %v39
    %v42 = vpop.xlane.xlu0 %41
    %43 = vadd.xlane.f32.xlu0 %v40
    %v44 = vpop.xlane.xlu0 %43
    %v45 = vmul.f32 %v42, 0.0078125
    %v46 = vmul.f32 %v44, 0.0078125
    %v47 = vsub.f32 %v39, %v45
    %v48 = vsub.f32 %v40, %v46
    %v49 = vmul.f32 %v47, %v47
    %v50 = vmul.f32 %v48, %v48
    %51 = vadd.xlane.f32.xlu0 %v49
    %v52 = vpop.xlane.xlu0 %51
    %53 = vadd.xlane.f32.xlu0 %v50
    %v54 = vpop.xlane.xlu0 %53
    %v55 = vmul.f32 %v52, 0.007874016
    %v56 = vmul.f32 %v54, 0.007874016
    %v57 = vrsqrt.pop %v55
    %v58 = vmul.f32 %v55, %v57
    %vm59 = vcmp.eq.f32.partialorder %v55, inf
    %v60 = vsel %vm59, %v55, %v58
    %vm61 = vcmp.eq.f32.partialorder %v55, 0.0
    %v62 = vand.u32 %v55, 2147483648
    %v63 = vsel %vm61, %v62, %v60
    %v64 = vrsqrt.pop %v56
    %v65 = vmul.f32 %v56, %v64
    %vm66 = vcmp.eq.f32.partialorder %v56, inf
    %v67 = vsel %vm66, %v56, %v65
    %vm68 = vcmp.eq.f32.partialorder %v56, 0.0
    %v69 = vand.u32 %v56, 2147483648
    %v70 = vsel %vm68, %v69, %v67
    %s71 = sld [smem:[#allocation6]]
    %v72 = vadd.f32 %v63, 1e-06
    %v73 = vadd.f32 %v70, 1e-06
    %v74 = vstv %s71
    %v75 = vrcp.pop %v72
    %v76 = vmul.f32 %v74, %v75
    %v77 = vrcp.pop %v73
    %v78 = vmul.f32 %v74, %v77
    %v79 = vmul.f32 %v47, %v76
    %v80 = vmul.f32 %v48, %v78
    %s81 = sld [smem:[#allocation6 + $0x1]]
    %v82 = vstv %s81
    %v83 = vadd.f32 %v79, %v82
    %v84 = vadd.f32 %v80, %v82
    %85 = vst [vmem:[#allocation7] sm:$0xff] %v83
    %86 = vst [vmem:[#allocation7 + $0x8] sm:$0xff] %v84
    // Predicated region
    $region18: #{tpu_custom_call.1} parent=1 // pred_check
      _
    $region19: #{tpu_custom_call.1} parent=1 // pred_check_branch
      %88 = sbr.rel (0) target = $region21
    $region20: #{tpu_custom_call.1} parent=1 // pred_region
      %s90 = ssub.s32 256, 256
      %91 = vsyncadd [#allocation4], %s90
      %s92 = sshll.u32 [#allocation7], 4
      %s93 = int_to_ptr.vmem [resolvable:$true] %s92
      %98 = dma.vmem_to_hbm [thread:$0]  %s93, 256, %s2, [#allocation4], 128, 128, 8
    $region21: #{tpu_custom_call.1} parent=1 // pred_fallthru
      _
    // Predicated region
    $region22: #{tpu_custom_call.1} parent=1 // pred_check
      _
    $region23: #{tpu_custom_call.1} parent=1 // pred_check_branch
      %100 = sbr.rel (0) target = $region25
    $region24: #{tpu_custom_call.1} parent=1 // pred_region
      %101 = dma.done [#allocation4], 256
    $region25: #{tpu_custom_call.1} parent=1 // pred_fallthru
      _
    %102 = vsyncpa [#allocation3], 1
    %103 = vsyncpa [#allocation4], 1
    %104 = vsyncpa [#allocation5], 1

</llo_original>
